<compile_context>
chip_gen: v7x
topology: tpu7x:2x2x1
jax: 0.10.0
libtpu: 0.0.40
codegen_flags: <defaults>
</compile_context>

<pallas_src>
import jax
import jax.numpy as jnp
from jax.experimental import pallas as pl
from jax.experimental.pallas import tpu as pltpu

EPS = 1e-5  # torch.nn.LayerNorm default


def _round_up(n, m):
    return ((n + m - 1) // m) * m


def _weight_spec(shape, index_map):
    """Single-buffered BlockSpec for resident (constant index_map) operands."""
    try:
        return pl.BlockSpec(shape, index_map, pipeline_mode=pl.Buffered(1))
    except TypeError:
        # Older BlockSpec signature without pipeline_mode: fall back.
        return pl.BlockSpec(shape, index_map)


def _ffn_kernel(x_ref, w1_ref, b1_ref, w2_ref, ob_ref, o_ref):
    # x_ref: (tm, Dp)   w1_ref: (Dp, H)   b1_ref: (1, H) f32
    # w2_ref: (H, Dp)   ob_ref: (1, Dp) f32   o_ref: (tm, Dp)

    # Feed the MXU in the weights' dtype (bf16 in production); f32 accumulate.
    x = x_ref[...].astype(w1_ref.dtype)
    h = jnp.dot(x, w1_ref[...], preferred_element_type=jnp.float32)
    h = jnp.maximum(h + b1_ref[...], 0.0)

    # LayerNorm statistics in f32, single pass (E[h^2] - mean^2).
    # h's last dim is the TRUE hidden size H (never padded).
    inv_h = 1.0 / h.shape[-1]
    mean = jnp.sum(h, axis=-1, keepdims=True) * inv_h
    mean_sq = jnp.sum(h * h, axis=-1, keepdims=True) * inv_h
    var = jnp.maximum(mean_sq - mean * mean, 0.0)
    hn = (h - mean) * jax.lax.rsqrt(var + EPS)

    # Second matmul: gamma pre-folded into W2', beta pre-folded into out_bias.
    out = jnp.dot(hn.astype(w2_ref.dtype), w2_ref[...],
                  preferred_element_type=jnp.float32)
    o_ref[...] = (out + ob_ref[...]).astype(o_ref.dtype)


def positionwise_ffn_decoder_sanm(x, w1, b1, gamma, beta, w2, *,
                                  tm=None,
                                  mxu_dtype=None,
                                  vmem_limit_bytes=None):
    """Compute w2 @ LayerNorm(relu(w1 @ x + b1)).

    x: (B, T, D).  w1: (D, H) (pre-transposed), b1/gamma/beta: (H,), w2: (H, D).
    mxu_dtype: optional dtype (e.g. jnp.bfloat16) for MXU operands; LayerNorm
    statistics and accumulation always stay in f32.
    """
    B, T, D = x.shape
    H = w1.shape[1]
    N = B * T

    # ---- Generation-aware defaults (v7x: 64 MiB VMEM, 2 TCs; else 128 MiB).
    try:
        vmem_cap = int(pltpu.get_tpu_info().vmem_capacity_bytes)
    except Exception:
        vmem_cap = 64 * 1024 * 1024  # conservative (v7x-like)
    small_vmem = vmem_cap <= 96 * 1024 * 1024
    if tm is None:
        tm = 256 if small_vmem else 512
    vmem_ceiling = (48 if small_vmem else 100) * 1024 * 1024

    # ---- Fold the LayerNorm affine into W2 / an output bias (f32 math). ----
    w_dtype = mxu_dtype if mxu_dtype is not None else w1.dtype
    w2_f32 = w2.astype(jnp.float32)
    w2_eff = (gamma.astype(jnp.float32)[:, None] * w2_f32).astype(w_dtype)
    out_bias = beta.astype(jnp.float32) @ w2_f32               # (D,), f32

    # ---- Padding: lane-dense output (D -> multiple of 128), ragged rows. ----
    D_pad = _round_up(D, 128)
    tm_eff = min(tm, _round_up(N, 8))          # don't over-tile tiny inputs
    # Prefer >= 2 grid steps so both v7x TensorCores get work.
    if N > 8 and _round_up(N, tm_eff) // tm_eff < 2:
        tm_eff = _round_up(-(-N // 2), 8)
    N_pad = _round_up(N, tm_eff)

    x2 = x.reshape(N, D)
    if (N_pad != N) or (D_pad != D):
        x2 = jnp.pad(x2, ((0, N_pad - N), (0, D_pad - D)))
    w1_p = (w1 if D_pad == D else jnp.pad(w1, ((0, D_pad - D), (0, 0))))
    w1_p = w1_p.astype(w_dtype)
    w2_p = w2_eff if D_pad == D else jnp.pad(w2_eff, ((0, 0), (0, D_pad - D)))
    ob_p = out_bias if D_pad == D else jnp.pad(out_bias, (0, D_pad - D))

    b1_2 = b1.astype(jnp.float32).reshape(1, H)                # f32 in wrapper
    ob_2 = ob_p.reshape(1, D_pad).astype(jnp.float32)          # f32 in wrapper

    grid = (N_pad // tm_eff,)

    # ---- VMEM budget: tiles (2x buffered) + weights (1x) + f32 LN temps. ----
    if vmem_limit_bytes is None:
        x_bytes = jnp.dtype(x.dtype).itemsize
        w_bytes = jnp.dtype(w_dtype).itemsize
        need = (2 * tm_eff * D_pad * x_bytes          # x tiles, double-buffered
                + 2 * tm_eff * D_pad * x_bytes        # out tiles, double-buffered
                + (D_pad * H + H * D_pad) * w_bytes   # resident weights (1x)
                + 2 * (H + D_pad) * 4                 # biases (f32)
                + 3 * tm_eff * H * 4)                 # matmul acc + LN temporaries
        vmem_limit_bytes = int(min(vmem_ceiling,
                                   max(32 * 1024 * 1024, int(need * 1.3))))

    # Advisory cost hint for XLA scheduling around the custom call.
    try:
        cost = pl.CostEstimate(
            flops=4 * N * D * H,
            transcendentals=N,
            bytes_accessed=(2 * N * D * jnp.dtype(x.dtype).itemsize
                            + 2 * D * H * jnp.dtype(w_dtype).itemsize))
    except Exception:
        cost = None

    out = pl.pallas_call(
        _ffn_kernel,
        out_shape=jax.ShapeDtypeStruct((N_pad, D_pad), x.dtype),
        grid_spec=pltpu.PrefetchScalarGridSpec(
            num_scalar_prefetch=0,
            grid=grid,
            in_specs=[
                pl.BlockSpec((tm_eff, D_pad), lambda i: (i, 0)),   # x rows
                _weight_spec((D_pad, H), lambda i: (0, 0)),        # W1 (resident)
                _weight_spec((1, H), lambda i: (0, 0)),            # b1 (f32)
                _weight_spec((H, D_pad), lambda i: (0, 0)),        # W2' (resident)
                _weight_spec((1, D_pad), lambda i: (0, 0)),        # out bias (f32)
            ],
            out_specs=pl.BlockSpec((tm_eff, D_pad), lambda i: (i, 0)),
        ),
        compiler_params=pltpu.CompilerParams(
            dimension_semantics=("parallel",),   # row axis shards across TCs
            vmem_limit_bytes=vmem_limit_bytes,
        ),
        cost_estimate=cost,
    )(x2, w1_p, b1_2, w2_p, ob_2)

    return out[:N, :D].reshape(B, T, D)


def _reference(x, w1, b1, gamma, beta, w2):
    h = jnp.maximum(jnp.einsum("btd,dh->bth", x, w1) + b1, 0.0)
    mean = jnp.mean(h, axis=-1, keepdims=True)
    var = jnp.mean((h - mean) ** 2, axis=-1, keepdims=True)
    hn = (h - mean) * jax.lax.rsqrt(var + EPS) * gamma + beta
    return jnp.einsum("bth,hd->btd", hn, w2)


if __name__ == "__main__":
    B, T, D, H = 2, 8, 32, 64

    key = jax.random.PRNGKey(0)
    kx, kw1, kb1, kg, kbe, kw2 = jax.random.split(key, 6)

    x = jax.random.normal(kx, (B, T, D), dtype=jnp.float32)
    # Linear weights stored pre-transposed as (in, out).
    w1 = jax.random.normal(kw1, (D, H), dtype=jnp.float32) * 0.1
    b1 = jax.random.normal(kb1, (H,), dtype=jnp.float32) * 0.1
    gamma = 1.0 + 0.1 * jax.random.normal(kg, (H,), dtype=jnp.float32)
    beta = 0.1 * jax.random.normal(kbe, (H,), dtype=jnp.float32)
    w2 = jax.random.normal(kw2, (H, D), dtype=jnp.float32) * 0.1

    ref = _reference(x, w1, b1, gamma, beta, w2)

    # Default (f32) MXU feed — bit-close to the reference.
    out = positionwise_ffn_decoder_sanm(x, w1, b1, gamma, beta, w2)
    out = jax.block_until_ready(out)
    assert out.shape == (B, T, D)
    assert jnp.allclose(out, ref, atol=1e-4, rtol=1e-4), float(
        jnp.max(jnp.abs(out - ref)))

    # Production bf16 MXU feed (v5e/v6e/v7x MXUs are bf16-native); LN stays f32.
    out_bf16 = positionwise_ffn_decoder_sanm(
        x, w1, b1, gamma, beta, w2, mxu_dtype=jnp.bfloat16)
    out_bf16 = jax.block_until_ready(out_bf16)
    assert jnp.allclose(out_bf16, ref, atol=1e-1, rtol=1e-1), float(
        jnp.max(jnp.abs(out_bf16 - ref)))

    print("KERNEL_OK")
</pallas_src>

<mosaic_0001>
module attributes {stable_mosaic.version = 11 : i64} {
  func.func @_ffn_kernel(%arg0: i32, %arg1: memref<8x128xf32, #tpu.memory_space<vmem>>, %arg2: memref<128x64xf32, #tpu.memory_space<vmem>>, %arg3: memref<1x64xf32, #tpu.memory_space<vmem>>, %arg4: memref<64x128xf32, #tpu.memory_space<vmem>>, %arg5: memref<1x128xf32, #tpu.memory_space<vmem>>, %arg6: memref<8x128xf32, #tpu.memory_space<vmem>>) attributes {dimension_semantics = [#tpu.dimension_semantics<parallel>], iteration_bounds = array<i64: 2>, scalar_prefetch = 0 : i64, scratch_operands = 0 : i64, tpu.core_type = #tpu.core_type<tc>, window_params = [{transform_indices = @transform_0, window_bounds = array<i64: 8, 128>}, {pipeline_mode = #tpu.pipeline_mode<synchronous>, transform_indices = @transform_1, window_bounds = array<i64: 128, 64>}, {pipeline_mode = #tpu.pipeline_mode<synchronous>, transform_indices = @transform_2, window_bounds = array<i64: 1, 64>}, {pipeline_mode = #tpu.pipeline_mode<synchronous>, transform_indices = @transform_3, window_bounds = array<i64: 64, 128>}, {pipeline_mode = #tpu.pipeline_mode<synchronous>, transform_indices = @transform_4, window_bounds = array<i64: 1, 128>}, {transform_indices = @transform_5, window_bounds = array<i64: 8, 128>}]} {
    %c0 = arith.constant 0 : index
    %c0_0 = arith.constant 0 : index
    %0 = vector.load %arg1[%c0, %c0_0] : memref<8x128xf32, #tpu.memory_space<vmem>>, vector<8x128xf32>
    %c0_1 = arith.constant 0 : index
    %c0_2 = arith.constant 0 : index
    %1 = vector.load %arg2[%c0_1, %c0_2] : memref<128x64xf32, #tpu.memory_space<vmem>>, vector<128x64xf32>
    %cst = arith.constant dense<0.000000e+00> : vector<8x64xf32>
    %2 = tpu.matmul %0, %1, %cst {dimension_numbers = #tpu.dot_dimension_numbers<[1], [0], [0], [1], [0, 0, 1, 1], [], []>} : vector<8x128xf32>, vector<128x64xf32>, vector<8x64xf32> -> vector<8x64xf32>
    %c0_3 = arith.constant 0 : index
    %c0_4 = arith.constant 0 : index
    %3 = vector.load %arg3[%c0_3, %c0_4] : memref<1x64xf32, #tpu.memory_space<vmem>>, vector<1x64xf32>
    %4 = vector.broadcast %3 : vector<1x64xf32> to vector<8x64xf32>
    %5 = arith.addf %2, %4 : vector<8x64xf32>
    %cst_5 = arith.constant 0.000000e+00 : f32
    %6 = vector.broadcast %cst_5 : f32 to vector<8x64xf32>
    %7 = arith.maximumf %5, %6 : vector<8x64xf32>
    %cst_6 = arith.constant dense<0.000000e+00> : vector<8xf32>
    %8 = vector.multi_reduction <add>, %7, %cst_6 [1] : vector<8x64xf32> to vector<8xf32>
    %9 = vector.shape_cast %8 : vector<8xf32> to vector<8x1xf32>
    %cst_7 = arith.constant 1.562500e-02 : f32
    %10 = vector.broadcast %cst_7 : f32 to vector<8x1xf32>
    %11 = arith.mulf %9, %10 : vector<8x1xf32>
    %12 = arith.mulf %7, %7 : vector<8x64xf32>
    %cst_8 = arith.constant dense<0.000000e+00> : vector<8xf32>
    %13 = vector.multi_reduction <add>, %12, %cst_8 [1] : vector<8x64xf32> to vector<8xf32>
    %14 = vector.shape_cast %13 : vector<8xf32> to vector<8x1xf32>
    %cst_9 = arith.constant 1.562500e-02 : f32
    %15 = vector.broadcast %cst_9 : f32 to vector<8x1xf32>
    %16 = arith.mulf %14, %15 : vector<8x1xf32>
    %17 = arith.mulf %11, %11 : vector<8x1xf32>
    %18 = arith.subf %16, %17 : vector<8x1xf32>
    %cst_10 = arith.constant 0.000000e+00 : f32
    %19 = vector.broadcast %cst_10 : f32 to vector<8x1xf32>
    %20 = arith.maximumf %18, %19 : vector<8x1xf32>
    %21 = vector.broadcast %11 : vector<8x1xf32> to vector<8x64xf32>
    %22 = arith.subf %7, %21 : vector<8x64xf32>
    %cst_11 = arith.constant 9.99999974E-6 : f32
    %23 = vector.broadcast %cst_11 : f32 to vector<8x1xf32>
    %24 = arith.addf %20, %23 : vector<8x1xf32>
    %25 = math.rsqrt %24 : vector<8x1xf32>
    %26 = vector.broadcast %25 : vector<8x1xf32> to vector<8x64xf32>
    %27 = arith.mulf %22, %26 : vector<8x64xf32>
    %c0_12 = arith.constant 0 : index
    %c0_13 = arith.constant 0 : index
    %28 = vector.load %arg4[%c0_12, %c0_13] : memref<64x128xf32, #tpu.memory_space<vmem>>, vector<64x128xf32>
    %cst_14 = arith.constant dense<0.000000e+00> : vector<8x128xf32>
    %29 = tpu.matmul %27, %28, %cst_14 {dimension_numbers = #tpu.dot_dimension_numbers<[1], [0], [0], [1], [0, 0, 1, 1], [], []>} : vector<8x64xf32>, vector<64x128xf32>, vector<8x128xf32> -> vector<8x128xf32>
    %c0_15 = arith.constant 0 : index
    %c0_16 = arith.constant 0 : index
    %30 = vector.load %arg5[%c0_15, %c0_16] : memref<1x128xf32, #tpu.memory_space<vmem>>, vector<1x128xf32>
    %31 = vector.broadcast %30 : vector<1x128xf32> to vector<8x128xf32>
    %32 = arith.addf %29, %31 : vector<8x128xf32>
    %c0_17 = arith.constant 0 : index
    %c0_18 = arith.constant 0 : index
    %33 = vector.load %arg6[%c0_17, %c0_18] : memref<8x128xf32, #tpu.memory_space<vmem>>, vector<8x128xf32>
    tpu.vector_store %arg6[%c0_17, %c0_18], %32 {strides = array<i32>} : memref<8x128xf32, #tpu.memory_space<vmem>>, vector<8x128xf32>,
    return
  }
  func.func @transform_0(%arg0: i32) -> (i32, i32) {
    %c0_i32 = arith.constant 0 : i32
    %c0_i32_0 = arith.constant 0 : i32
    return %arg0, %c0_i32 : i32, i32
  }
  func.func @transform_1(%arg0: i32) -> (i32, i32) {
    %c0_i32 = arith.constant 0 : i32
    %c0_i32_0 = arith.constant 0 : i32
    %c0_i32_1 = arith.constant 0 : i32
    return %c0_i32, %c0_i32_0 : i32, i32
  }
  func.func @transform_2(%arg0: i32) -> (i32, i32) {
    %c0_i32 = arith.constant 0 : i32
    %c0_i32_0 = arith.constant 0 : i32
    %c0_i32_1 = arith.constant 0 : i32
    return %c0_i32, %c0_i32_0 : i32, i32
  }
  func.func @transform_3(%arg0: i32) -> (i32, i32) {
    %c0_i32 = arith.constant 0 : i32
    %c0_i32_0 = arith.constant 0 : i32
    %c0_i32_1 = arith.constant 0 : i32
    return %c0_i32, %c0_i32_0 : i32, i32
  }
  func.func @transform_4(%arg0: i32) -> (i32, i32) {
    %c0_i32 = arith.constant 0 : i32
    %c0_i32_0 = arith.constant 0 : i32
    %c0_i32_1 = arith.constant 0 : i32
    return %c0_i32, %c0_i32_0 : i32, i32
  }
  func.func @transform_5(%arg0: i32) -> (i32, i32) {
    %c0_i32 = arith.constant 0 : i32
    %c0_i32_0 = arith.constant 0 : i32
    return %arg0, %c0_i32 : i32, i32
  }
}

</mosaic_0001>

<llo_original>
// kernel: tpu_custom_call.1
$region0: #{tpu_custom_call.1}
  #allocation0 [shape = 'u32[]', space=smem, size = 0x4, offset = 0x4, fixed_abs, tag = 'smem constant byte address 0x4 - core index']
  #allocation1 [shape = 'u32[144,128]{1,0:T(1,128)}', space=vmem, size = 0x12000, scoped, tag = 'internal scratch']
  %s0 = inlined_call_operand.vmem [shape: f32[16,128], index: 0, kind: input, shape index: {}]
  %s1 = inlined_call_operand.vmem [shape: f32[128,64], index: 1, kind: input, shape index: {}]
  %s2 = inlined_call_operand.vmem [shape: f32[1,64], index: 2, kind: input, shape index: {}]
  %s3 = inlined_call_operand.vmem [shape: f32[64,128], index: 3, kind: input, shape index: {}]
  %s4 = inlined_call_operand.vmem [shape: f32[1,128], index: 4, kind: input, shape index: {}]
  %s5 = inlined_call_operand.hbm [shape: f32[16,128], index: 5, kind: output, shape index: {}]
  %s6 = sld [smem:[#allocation0]]
  $region53: #{tpu_custom_call.1} parent=0
    _
  %s8 = ssub.s32 1, %s6
  %s9 = scalar_select 0, %s8, %s6
  $region1: #{tpu_custom_call.1} parent=0
    #allocation2 [shape = 'u8[8192]{0}', space=vmem, size = 0x2000, scoped, tag = 'output window, operand 0']
    #allocation3 [shape = 's32[2]{0}', space=sflag, size = 0x8, scoped, tag = 'scoped memory for tpu_custom_call.1']
    %10 = vsyncpa [#allocation3], 0
    %s11 = scalar_lea.sflag [#allocation3], 1
    %12 = vsyncpa %s11, 0
    loop: start=0, step=1, limit=4
    $region2: #{tpu_custom_call.1} parent=1 // loop_pre_header
      _
    $region3: #{tpu_custom_call.1} parent=1 // loop_header
      %s14 = sphi 0, %s18
      %p15 = scmp.ge.s32.totalorder %s14, 4
      %s24 = sphi 0, %s26
      %s27 = sphi 0, %s24
      %s28 = sphi 0, %s27
      %s44 = sphi 0, %s28
      %s48 = sphi 0, %s48
      %s50 = sphi 0, %s48
      %s51 = sphi 0, %s50
      %s65 = sphi 0, %s51
      %s69 = sphi 0, %s69
      %s71 = sphi 0, %s69
      %s72 = sphi 0, %s71
      %s86 = sphi 0, %s72
      %s90 = sphi 0, %s90
      %s92 = sphi 0, %s90
      %s93 = sphi 0, %s92
      %s107 = sphi 0, %s93
      %s111 = sphi 0, %s111
      %s113 = sphi 0, %s111
      %s114 = sphi 0, %s113
      %s128 = sphi 0, %s114
      %s134 = sphi 0, %s136
      %s137 = sphi 0, %s134
      %s138 = sphi 0, %s137
      %s154 = sphi 0, %s138
    $region4: #{tpu_custom_call.1} parent=1 // loop_header_branch
      %17 = sbr.rel (%p15) target = $region8
    $region5: #{tpu_custom_call.1} parent=1 // loop_body
      %s19 = ssub.s32 %s14, 1
      %s20 = ssub.s32 %s14, 2
      %s21 = sadd.s32 %s14, 1
      %s22 = ssub.s32 %s14, %s21
      %p23 = scmp.eq.s32.totalorder %s22, 0
      %s25 = sadd.s32 %s24, 1
      %s26 = scalar_select %p23, %s24, %s25
      %p29 = pneg %p23
      %p30 = scmp.eq.s32.totalorder %s14, 1
      %p31 = por %p29, %p30
      %p32 = scmp.ne.s32.totalorder %s24, %s27
      %p33 = scmp.eq.s32.totalorder %s14, 0
      %p34 = por %p32, %p33
      %p35 = scmp.ne.s32.totalorder %s24, %s27
      %p36 = scmp.eq.s32.totalorder %s19, 1
      %p37 = por %p35, %p36
      %p38 = scmp.ne.s32.totalorder %s27, %s28
      %p39 = scmp.eq.s32.totalorder %s19, 0
      %p40 = por %p38, %p39
      %p41 = scmp.ne.s32.totalorder %s27, %s28
      %p42 = scmp.eq.s32.totalorder %s20, 1
      %p43 = por %p41, %p42
      %p45 = scmp.ne.s32.totalorder %s28, %s44
      %p46 = scmp.eq.s32.totalorder %s20, 0
      %p47 = por %p45, %p46
      %s49 = sadd.s32 %s48, 1
      %p52 = scmp.eq.s32.totalorder %s14, 1
      %p53 = scmp.ne.s32.totalorder %s48, %s50
      %p54 = scmp.eq.s32.totalorder %s14, 0
      %p55 = por %p53, %p54
      %p56 = scmp.ne.s32.totalorder %s48, %s50
      %p57 = scmp.eq.s32.totalorder %s19, 1
      %p58 = por %p56, %p57
      %p59 = scmp.ne.s32.totalorder %s50, %s51
      %p60 = scmp.eq.s32.totalorder %s19, 0
      %p61 = por %p59, %p60
      %p62 = scmp.ne.s32.totalorder %s50, %s51
      %p63 = scmp.eq.s32.totalorder %s20, 1
      %p64 = por %p62, %p63
      %p66 = scmp.ne.s32.totalorder %s51, %s65
      %p67 = scmp.eq.s32.totalorder %s20, 0
      %p68 = por %p66, %p67
      %s70 = sadd.s32 %s69, 1
      %p73 = scmp.eq.s32.totalorder %s14, 1
      %p74 = scmp.ne.s32.totalorder %s69, %s71
      %p75 = scmp.eq.s32.totalorder %s14, 0
      %p76 = por %p74, %p75
      %p77 = scmp.ne.s32.totalorder %s69, %s71
      %p78 = scmp.eq.s32.totalorder %s19, 1
      %p79 = por %p77, %p78
      %p80 = scmp.ne.s32.totalorder %s71, %s72
      %p81 = scmp.eq.s32.totalorder %s19, 0
      %p82 = por %p80, %p81
      %p83 = scmp.ne.s32.totalorder %s71, %s72
      %p84 = scmp.eq.s32.totalorder %s20, 1
      %p85 = por %p83, %p84
      %p87 = scmp.ne.s32.totalorder %s72, %s86
      %p88 = scmp.eq.s32.totalorder %s20, 0
      %p89 = por %p87, %p88
      %s91 = sadd.s32 %s90, 1
      %p94 = scmp.eq.s32.totalorder %s14, 1
      %p95 = scmp.ne.s32.totalorder %s90, %s92
      %p96 = scmp.eq.s32.totalorder %s14, 0
      %p97 = por %p95, %p96
      %p98 = scmp.ne.s32.totalorder %s90, %s92
      %p99 = scmp.eq.s32.totalorder %s19, 1
      %p100 = por %p98, %p99
      %p101 = scmp.ne.s32.totalorder %s92, %s93
      %p102 = scmp.eq.s32.totalorder %s19, 0
      %p103 = por %p101, %p102
      %p104 = scmp.ne.s32.totalorder %s92, %s93
      %p105 = scmp.eq.s32.totalorder %s20, 1
      %p106 = por %p104, %p105
      %p108 = scmp.ne.s32.totalorder %s93, %s107
      %p109 = scmp.eq.s32.totalorder %s20, 0
      %p110 = por %p108, %p109
      %s112 = sadd.s32 %s111, 1
      %p115 = scmp.eq.s32.totalorder %s14, 1
      %p116 = scmp.ne.s32.totalorder %s111, %s113
      %p117 = scmp.eq.s32.totalorder %s14, 0
      %p118 = por %p116, %p117
      %p119 = scmp.ne.s32.totalorder %s111, %s113
      %p120 = scmp.eq.s32.totalorder %s19, 1
      %p121 = por %p119, %p120
      %p122 = scmp.ne.s32.totalorder %s113, %s114
      %p123 = scmp.eq.s32.totalorder %s19, 0
      %p124 = por %p122, %p123
      %p125 = scmp.ne.s32.totalorder %s113, %s114
      %p126 = scmp.eq.s32.totalorder %s20, 1
      %p127 = por %p125, %p126
      %p129 = scmp.ne.s32.totalorder %s114, %s128
      %p130 = scmp.eq.s32.totalorder %s20, 0
      %p131 = por %p129, %p130
      %s132 = ssub.s32 %s14, %s21
      %p133 = scmp.eq.s32.totalorder %s132, 0
      %s135 = sadd.s32 %s134, 1
      %s136 = scalar_select %p133, %s134, %s135
      %p139 = pneg %p133
      %p140 = scmp.eq.s32.totalorder %s14, 1
      %p141 = por %p139, %p140
      %p142 = scmp.ne.s32.totalorder %s134, %s137
      %p143 = scmp.eq.s32.totalorder %s14, 0
      %p144 = por %p142, %p143
      %p145 = scmp.ne.s32.totalorder %s134, %s137
      %p146 = scmp.eq.s32.totalorder %s19, 1
      %p147 = por %p145, %p146
      %p148 = scmp.ne.s32.totalorder %s137, %s138
      %p149 = scmp.eq.s32.totalorder %s19, 0
      %p150 = por %p148, %p149
      %p151 = scmp.ne.s32.totalorder %s137, %s138
      %p152 = scmp.eq.s32.totalorder %s20, 1
      %p153 = por %p151, %p152
      %p155 = scmp.ne.s32.totalorder %s138, %s154
      %p156 = scmp.eq.s32.totalorder %s20, 0
      %p157 = por %p155, %p156
      %p158 = scmp.le.s32.totalorder 1, %s14
      %p159 = scmp.lt.s32.totalorder %s14, 3
      %p160 = pnand %p158, %p159
      %p161 = pneg %p160
      // Predicated region
      $region9: #{tpu_custom_call.1} parent=5 // pred_check
        _
      $region10: #{tpu_custom_call.1} parent=5 // pred_check_branch
        %163 = sbr.rel (%p160) target = $region12
      $region11: #{tpu_custom_call.1} parent=5 // pred_region
        %s164 = ssub.s32 %s14, 1
        // Predicated region
        $region13: #{tpu_custom_call.1} parent=11 // pred_check
          %p165 = pneg %p61
        $region14: #{tpu_custom_call.1} parent=11 // pred_check_branch
          %167 = sbr.rel (%p165) target = $region16
        $region15: #{tpu_custom_call.1} parent=11 // pred_region
          _
        $region16: #{tpu_custom_call.1} parent=11 // pred_fallthru
          _
        // Predicated region
        $region17: #{tpu_custom_call.1} parent=11 // pred_check
          %p168 = pneg %p82
        $region18: #{tpu_custom_call.1} parent=11 // pred_check_branch
          %170 = sbr.rel (%p168) target = $region20
        $region19: #{tpu_custom_call.1} parent=11 // pred_region
          _
        $region20: #{tpu_custom_call.1} parent=11 // pred_fallthru
          _
        // Predicated region
        $region21: #{tpu_custom_call.1} parent=11 // pred_check
          %p171 = pneg %p103
        $region22: #{tpu_custom_call.1} parent=11 // pred_check_branch
          %173 = sbr.rel (%p171) target = $region24
        $region23: #{tpu_custom_call.1} parent=11 // pred_region
          _
        $region24: #{tpu_custom_call.1} parent=11 // pred_fallthru
          _
        // Predicated region
        $region25: #{tpu_custom_call.1} parent=11 // pred_check
          %p174 = pneg %p124
        $region26: #{tpu_custom_call.1} parent=11 // pred_check_branch
          %176 = sbr.rel (%p174) target = $region28
        $region27: #{tpu_custom_call.1} parent=11 // pred_region
          _
        $region28: #{tpu_custom_call.1} parent=11 // pred_fallthru
          _
      $region12: #{tpu_custom_call.1} parent=5 // pred_fallthru
        _
      %p177 = scmp.lt.s32.totalorder %s14, 2
      // Predicated region
      $region29: #{tpu_custom_call.1} parent=5 // pred_check
        %p178 = pneg %p177
      $region30: #{tpu_custom_call.1} parent=5 // pred_check_branch
        %180 = sbr.rel (%p178) target = $region32
      $region31: #{tpu_custom_call.1} parent=5 // pred_region
        // Predicated region
        $region33: #{tpu_custom_call.1} parent=31 // pred_check
          %p181 = pneg %p34
        $region34: #{tpu_custom_call.1} parent=31 // pred_check_branch
          %183 = sbr.rel (%p181) target = $region36
        $region35: #{tpu_custom_call.1} parent=31 // pred_region
          %p184 = scmp.lt.s32.totalorder %s14, 1
          %s185 = scalar_select %p184, %s14, 1
          %s186 = smul.addr %s185, 8
          %s187 = scalar_lea.vmem %s0, %s186
        $region36: #{tpu_custom_call.1} parent=31 // pred_fallthru
          _
      $region32: #{tpu_custom_call.1} parent=5 // pred_fallthru
        _
      %p188 = scmp.le.s32.totalorder 1, %s14
      %p189 = scmp.lt.s32.totalorder %s14, 3
      %p190 = pnand %p188, %p189
      %p191 = pneg %p190
      // Predicated region
      $region37: #{tpu_custom_call.1} parent=5 // pred_check
        _
      $region38: #{tpu_custom_call.1} parent=5 // pred_check_branch
        %193 = sbr.rel (%p190) target = $region40
      $region39: #{tpu_custom_call.1} parent=5 // pred_region
        %s194 = ssub.s32 %s14, 1
        %p195 = scmp.lt.s32.totalorder %s19, 1
        %s196 = scalar_select %p195, %s19, 1
        %s197 = smul.addr %s196, 8
        %s198 = scalar_lea.vmem %s0, %s197
        %p199 = pneg %p40
        %p200 = pneg %p37
        %p201 = pneg %p61
        %p202 = pneg %p58
        %p203 = pneg %p82
        %p204 = pneg %p79
        %p205 = pneg %p103
        %p206 = pneg %p100
        %p207 = pneg %p124
        %p208 = pneg %p121
        %p209 = pneg %p150
        %p210 = pneg %p147
        %s211 = sand.u32 %s137, 1
        %s212 = scalar_lea.sflag [#allocation3], %s211
        %s213 = sand.u32 %s137, 1
        %s214 = smul.addr %s213, 8
        %s215 = scalar_lea.vmem [#allocation2], %s214
        %p216 = scmp.lt.s32.totalorder %s19, 1
        %s217 = scalar_select %p216, %s19, 1
        %s218 = smul.addr %s217, 8
        %s219 = scalar_lea.vmem %s0, %s218
        %v220 = vld [vmem:[%s219] sm:$0xff]
        %v221 = vld [vmem:[%s1] sm:$0xff]
        %v222 = vld [vmem:[%s1 + $0x8] sm:$0xff]
        %v223 = vld [vmem:[%s1 + $0x10] sm:$0xff]
        %v224 = vld [vmem:[%s1 + $0x18] sm:$0xff]
        %v225 = vld [vmem:[%s1 + $0x20] sm:$0xff]
        %v226 = vld [vmem:[%s1 + $0x28] sm:$0xff]
        %v227 = vld [vmem:[%s1 + $0x30] sm:$0xff]
        %v228 = vld [vmem:[%s1 + $0x38] sm:$0xff]
        %v229 = vld [vmem:[%s1 + $0x40] sm:$0xff]
        %v230 = vld [vmem:[%s1 + $0x48] sm:$0xff]
        %v231 = vld [vmem:[%s1 + $0x50] sm:$0xff]
        %v232 = vld [vmem:[%s1 + $0x58] sm:$0xff]
        %v233 = vld [vmem:[%s1 + $0x60] sm:$0xff]
        %v234 = vld [vmem:[%s1 + $0x68] sm:$0xff]
        %v235 = vld [vmem:[%s1 + $0x70] sm:$0xff]
        %v236 = vld [vmem:[%s1 + $0x78] sm:$0xff]
        %v237 = vld [vmem:[%s2] sm:$0x1]
        %v239 = vlaneseq
        %v240 = vshrl.u32 %v239, 7
        %v241 = vsub.s32 0, %v240
        %v242 = vrot.slane %v237, %v241
        %244 = vmatprep.subr.mxu0 0.0
        %245 = vmatpush1.msra.mxu0 %v221
        %246 = vmatprep.subr.mxu0 0.0
        %247 = vmatpush1.msra.mxu0 %v222
        %248 = vmatprep.subr.mxu0 0.0
        %249 = vmatpush1.msra.mxu0 %v223
        %250 = vmatprep.subr.mxu0 0.0
        %251 = vmatpush1.msra.mxu0 %v224
        %252 = vmatprep.subr.mxu0 0.0
        %253 = vmatpush1.msra.mxu0 %v225
        %254 = vmatprep.subr.mxu0 0.0
        %255 = vmatpush1.msra.mxu0 %v226
        %256 = vmatprep.subr.mxu0 0.0
        %257 = vmatpush1.msra.mxu0 %v227
        %258 = vmatprep.subr.mxu0 0.0
        %259 = vmatpush1.msra.mxu0 %v228
        %260 = vmatprep.subr.mxu0 0.0
        %261 = vmatpush1.msra.mxu0 %v229
        %262 = vmatprep.subr.mxu0 0.0
        %263 = vmatpush1.msra.mxu0 %v230
        %264 = vmatprep.subr.mxu0 0.0
        %265 = vmatpush1.msra.mxu0 %v231
        %266 = vmatprep.subr.mxu0 0.0
        %267 = vmatpush1.msra.mxu0 %v232
        %268 = vmatprep.subr.mxu0 0.0
        %269 = vmatpush1.msra.mxu0 %v233
        %270 = vmatprep.subr.mxu0 0.0
        %271 = vmatpush1.msra.mxu0 %v234
        %272 = vmatprep.subr.mxu0 0.0
        %273 = vmatpush1.msra.mxu0 %v235
        %274 = vmatprep.subr.mxu0 0.0
        %275 = vmatpush1.msra.mxu0 %v236
        %276 = vmatprep.subr.mxu0 0.0
        %277 = vmatpush1.msra.mxu0 0.0
        %278 = vmatprep.subr.mxu0 0.0
        %279 = vmatpush1.msra.mxu0 0.0
        %280 = vmatprep.subr.mxu0 0.0
        %281 = vmatpush1.msra.mxu0 0.0
        %282 = vmatprep.subr.mxu0 0.0
        %283 = vmatpush1.msra.mxu0 0.0
        %284 = vmatprep.subr.mxu0 0.0
        %285 = vmatpush1.msra.mxu0 0.0
        %286 = vmatprep.subr.mxu0 0.0
        %287 = vmatpush1.msra.mxu0 0.0
        %288 = vmatprep.subr.mxu0 0.0
        %289 = vmatpush1.msra.mxu0 0.0
        %290 = vmatprep.subr.mxu0 0.0
        %291 = vmatpush1.msra.mxu0 0.0
        %292 = vmatprep.subr.mxu0 0.0
        %293 = vmatpush1.msra.mxu0 0.0
        %294 = vmatprep.subr.mxu0 0.0
        %295 = vmatpush1.msra.mxu0 0.0
        %296 = vmatprep.subr.mxu0 0.0
        %297 = vmatpush1.msra.mxu0 0.0
        %298 = vmatprep.subr.mxu0 0.0
        %299 = vmatpush1.msra.mxu0 0.0
        %300 = vmatprep.subr.mxu0 0.0
        %301 = vmatpush1.msra.mxu0 0.0
        %302 = vmatprep.subr.mxu0 0.0
        %303 = vmatpush1.msra.mxu0 0.0
        %304 = vmatprep.subr.mxu0 0.0
        %305 = vmatpush1.msra.mxu0 0.0
        %306 = vmatprep.subr.mxu0 0.0
        %307 = vmatpush1.msra.mxu0 0.0
        %308 = vmatprep.mubr.f32.mxu0 0.0
        %309 = vmatmul.mubr.f32.gmra.mrb[0].mxu0 %v220
        %v310 = vpop.f32.mrb[0].mxu0
        %v311 = vadd.f32 %v242, %v310
        %v312 = vpop.f32.mrb[0].mxu0
        %313 = vdwg.mxu0
        %v314 = vmax.f32 %v311, 0.0
        %vm315 = vcmask 523264
        %v316 = vsel %vm315, %v314, 0.0
        %317 = vadd.xlane.f32.xlu0 %v316
        %v318 = vpop.xlane.xlu0 %317
        %v319 = vmul.f32 %v318, 0.015625
        %v320 = vmul.f32 %v314, %v314
        %v321 = vsel %vm315, %v320, 0.0
        %322 = vadd.xlane.f32.xlu0 %v321
        %v323 = vpop.xlane.xlu0 %322
        %v324 = vmul.f32 %v323, 0.015625
        %v325 = vmul.f32 %v319, %v319
        %v326 = vsub.f32 %v324, %v325
        %v327 = vmax.f32 %v326, 0.0
        %v328 = vsub.f32 %v314, %v319
        %v329 = vadd.f32 %v327, 1e-05
        %v330 = vrsqrt.pop %v329
        %v331 = vmul.f32 %v328, %v330
        %v332 = vld [vmem:[%s3] sm:$0xff]
        %v333 = vld [vmem:[%s3 + $0x8] sm:$0xff]
        %v334 = vld [vmem:[%s3 + $0x10] sm:$0xff]
        %v335 = vld [vmem:[%s3 + $0x18] sm:$0xff]
        %v336 = vld [vmem:[%s3 + $0x20] sm:$0xff]
        %v337 = vld [vmem:[%s3 + $0x28] sm:$0xff]
        %v338 = vld [vmem:[%s3 + $0x30] sm:$0xff]
        %v339 = vld [vmem:[%s3 + $0x38] sm:$0xff]
        %v340 = vld [vmem:[%s4] sm:$0x1]
        %v342 = vlaneseq
        %v343 = vshrl.u32 %v342, 7
        %v344 = vsub.s32 0, %v343
        %v345 = vrot.slane %v340, %v344
        %v348 = vsel %vm315, %v331, 0
        %350 = vmatprep.subr.mxu0 0.0
        %351 = vmatpush1.msra.mxu0 %v332
        %352 = vmatprep.subr.mxu0 0.0
        %353 = vmatpush1.msra.mxu0 %v333
        %354 = vmatprep.subr.mxu0 0.0
        %355 = vmatpush1.msra.mxu0 %v334
        %356 = vmatprep.subr.mxu0 0.0
        %357 = vmatpush1.msra.mxu0 %v335
        %358 = vmatprep.subr.mxu0 0.0
        %359 = vmatpush1.msra.mxu0 %v336
        %360 = vmatprep.subr.mxu0 0.0
        %361 = vmatpush1.msra.mxu0 %v337
        %362 = vmatprep.subr.mxu0 0.0
        %363 = vmatpush1.msra.mxu0 %v338
        %364 = vmatprep.subr.mxu0 0.0
        %365 = vmatpush1.msra.mxu0 %v339
        %366 = vmatprep.subr.mxu0 0.0
        %367 = vmatpush1.msra.mxu0 0.0
        %368 = vmatprep.subr.mxu0 0.0
        %369 = vmatpush1.msra.mxu0 0.0
        %370 = vmatprep.subr.mxu0 0.0
        %371 = vmatpush1.msra.mxu0 0.0
        %372 = vmatprep.subr.mxu0 0.0
        %373 = vmatpush1.msra.mxu0 0.0
        %374 = vmatprep.subr.mxu0 0.0
        %375 = vmatpush1.msra.mxu0 0.0
        %376 = vmatprep.subr.mxu0 0.0
        %377 = vmatpush1.msra.mxu0 0.0
        %378 = vmatprep.subr.mxu0 0.0
        %379 = vmatpush1.msra.mxu0 0.0
        %380 = vmatprep.subr.mxu0 0.0
        %381 = vmatpush1.msra.mxu0 0.0
        %382 = vmatprep.subr.mxu0 0.0
        %383 = vmatpush1.msra.mxu0 0.0
        %384 = vmatprep.subr.mxu0 0.0
        %385 = vmatpush1.msra.mxu0 0.0
        %386 = vmatprep.subr.mxu0 0.0
        %387 = vmatpush1.msra.mxu0 0.0
        %388 = vmatprep.subr.mxu0 0.0
        %389 = vmatpush1.msra.mxu0 0.0
        %390 = vmatprep.subr.mxu0 0.0
        %391 = vmatpush1.msra.mxu0 0.0
        %392 = vmatprep.subr.mxu0 0.0
        %393 = vmatpush1.msra.mxu0 0.0
        %394 = vmatprep.subr.mxu0 0.0
        %395 = vmatpush1.msra.mxu0 0.0
        %396 = vmatprep.subr.mxu0 0.0
        %397 = vmatpush1.msra.mxu0 0.0
        %398 = vmatprep.subr.mxu0 0.0
        %399 = vmatpush1.msra.mxu0 0.0
        %400 = vmatprep.subr.mxu0 0.0
        %401 = vmatpush1.msra.mxu0 0.0
        %402 = vmatprep.subr.mxu0 0.0
        %403 = vmatpush1.msra.mxu0 0.0
        %404 = vmatprep.subr.mxu0 0.0
        %405 = vmatpush1.msra.mxu0 0.0
        %406 = vmatprep.subr.mxu0 0.0
        %407 = vmatpush1.msra.mxu0 0.0
        %408 = vmatprep.subr.mxu0 0.0
        %409 = vmatpush1.msra.mxu0 0.0
        %410 = vmatprep.subr.mxu0 0.0
        %411 = vmatpush1.msra.mxu0 0.0
        %412 = vmatprep.subr.mxu0 0.0
        %413 = vmatpush1.msra.mxu0 0.0
        %414 = vmatprep.mubr.f32.mxu0 0.0
        %415 = vmatmul.mubr.f32.gmra.mrb[0].mxu0 %v348
        %v416 = vpop.f32.mrb[0].mxu0
        %v417 = vadd.f32 %v345, %v416
        %v418 = vpop.f32.mrb[0].mxu0
        %419 = vdwg.mxu0
        %420 = vst [vmem:[%s215] sm:$0xff] %v417
        %s421 = sand.u32 %s137, 1
        %s422 = scalar_lea.sflag [#allocation3], %s421
        %s423 = sand.u32 %s137, 1
        %s424 = smul.addr %s423, 8
        %s425 = scalar_lea.vmem [#allocation2], %s424
        // Predicated region
        $region41: #{tpu_custom_call.1} parent=39 // pred_check
          %p426 = pneg %p147
        $region42: #{tpu_custom_call.1} parent=39 // pred_check_branch
          %428 = sbr.rel (%p426) target = $region44
        $region43: #{tpu_custom_call.1} parent=39 // pred_region
          %s430 = ssub.s32 128, 128
          %431 = vsyncadd %s422, %s430
          %s432 = smul.addr %s19, 128
          %s433 = scalar_lea.hbm %s5, %s432
          %s435 = sshll.u32 %s425, 4
          %s436 = int_to_ptr.vmem [resolvable:$true] %s435
          %438 = dma.vmem_to_hbm [thread:$0]  %s436, 128, %s433, %s422
        $region44: #{tpu_custom_call.1} parent=39 // pred_fallthru
          _
      $region40: #{tpu_custom_call.1} parent=5 // pred_fallthru
        _
      %p439 = scmp.le.s32.totalorder 2, %s14
      // Predicated region
      $region45: #{tpu_custom_call.1} parent=5 // pred_check
        %p440 = pneg %p439
      $region46: #{tpu_custom_call.1} parent=5 // pred_check_branch
        %442 = sbr.rel (%p440) target = $region48
      $region47: #{tpu_custom_call.1} parent=5 // pred_region
        %s443 = ssub.s32 %s14, 2
        // Predicated region
        $region49: #{tpu_custom_call.1} parent=47 // pred_check
          %p444 = pneg %p153
        $region50: #{tpu_custom_call.1} parent=47 // pred_check_branch
          %446 = sbr.rel (%p444) target = $region52
        $region51: #{tpu_custom_call.1} parent=47 // pred_region
          %s447 = sand.u32 %s138, 1
          %s448 = scalar_lea.sflag [#allocation3], %s447
          %s449 = sand.u32 %s138, 1
          %s450 = smul.addr %s449, 8
          %s451 = scalar_lea.vmem [#allocation2], %s450
          %452 = dma.done %s448, 128
        $region52: #{tpu_custom_call.1} parent=47 // pred_fallthru
          _
      $region48: #{tpu_custom_call.1} parent=5 // pred_fallthru
        _
    $region6: #{tpu_custom_call.1} parent=1 // loop_footer
      %s18 = sadd.s32 1, %s14
    $region7: #{tpu_custom_call.1} parent=1 // loop_footer_branch
      %13 = sbr.rel target = $region3
    $region8: #{tpu_custom_call.1} parent=1 // loop_exit
      _
    %453 = vsyncpa [#allocation3], 1
    %s454 = scalar_lea.sflag [#allocation3], 1
    %455 = vsyncpa %s454, 1

</llo_original>
